<compile_context>
chip_gen: v6e
topology: v6e:2x2x1
jax: 0.10.0
libtpu: 0.0.40
codegen_flags: <defaults>
</compile_context>

<pallas_src>
import jax
import jax.numpy as jnp
from jax.experimental import pallas as pl
from jax.experimental.pallas import tpu as pltpu


def _round_up(x, m):
    return ((x + m - 1) // m) * m


# ----------------------------------------------------------------------------- kernel
def actor_critic_kernel(x_ref, w1_ref, b1_ref, w2_ref, b2_ref, out_ref):
    # Fused layer 1 (critic | actor): (TM, D) @ (D, 2H) on the MXU, f32 accumulate.
    # Cast x to the weight compute dtype on the VPU (no-op for f32, free for bf16).
    x = x_ref[...].astype(w1_ref.dtype)
    h = jnp.dot(x, w1_ref[...], preferred_element_type=jnp.float32) + b1_ref[...]
    h = jnp.maximum(h, 0.0)
    # Fused block-diagonal layer 2: (TM, 2H) @ (2H, n_out) -> [mu | value | pad].
    out_ref[...] = (
        jnp.dot(h.astype(w2_ref.dtype), w2_ref[...],
                preferred_element_type=jnp.float32) + b2_ref[...]
    ).astype(out_ref.dtype)


# ----------------------------------------------------------------------------- packing (one-time)
def prepare_params(params, compute_dtype=jnp.float32):
    """One-time packing of raw ActorCritic params into the fused kernel layout.

    Call at init / after each optimizer step, NOT per forward call.
    """
    D, H = params["w1c"].shape
    A = params["w2a"].shape[1]
    n_out = max(_round_up(A + 1, 8), 8)   # narrow output slab: [mu(0:A) | value(A) | pad]

    # Fused first layer: [w1c | w1a] -> (D, 2H).  No D padding (Mosaic pads K).
    w1 = jnp.concatenate([params["w1c"], params["w1a"]], axis=1).astype(compute_dtype)
    b1 = jnp.concatenate([params["b1c"], params["b1a"]], axis=1).astype(jnp.float32)

    # Fused block-diagonal second layer:
    #   actor half  (rows H:2H) -> mu lanes 0:A
    #   critic half (rows 0:H)  -> value lane A
    w2 = jnp.zeros((2 * H, n_out), jnp.float32)
    w2 = w2.at[H:, :A].set(params["w2a"])
    w2 = w2.at[:H, A:A + 1].set(params["w2c"])
    w2 = w2.astype(compute_dtype)

    b2 = jnp.zeros((1, n_out), jnp.float32)
    b2 = b2.at[:, :A].set(params["b2a"])
    b2 = b2.at[:, A:A + 1].set(params["b2c"])

    return {
        "w1": w1, "b1": b1, "w2": w2, "b2": b2,
        # std is x-independent: precompute exp(log_std) here too.
        "std_row": jnp.exp(params["log_std"]).astype(jnp.float32),
    }


# ----------------------------------------------------------------------------- forward
def _choose_tm(B):
    # Big tiles amortize the ~0.35us per-grid-step overhead; >= 2 steps once
    # B >= 1024 so the "parallel" axis shards across v7x's two TensorCores.
    # TM=2048 footprint (x 2buf + out 2buf + h + weights) ~ 8 MiB, well under
    # the default scoped VMEM on v5e/v6e/v7x.
    if B >= 4096:
        return 2048
    if B >= 1024:
        return _round_up(pl.cdiv(B, 2), 8)
    return _round_up(max(B, 1), 8)


def actor_critic_forward(x, packed):
    """Returns (mu, std, value): Normal(mu, std) parameters and critic value."""
    B, D = x.shape
    w1, b1, w2, b2 = packed["w1"], packed["b1"], packed["w2"], packed["b2"]
    two_h = w1.shape[1]
    n_out = w2.shape[1]
    A = packed["std_row"].shape[1]

    TM = _choose_tm(B)

    out = pl.pallas_call(
        actor_critic_kernel,
        out_shape=jax.ShapeDtypeStruct((B, n_out), jnp.float32),
        grid=(pl.cdiv(B, TM),),
        in_specs=[
            pl.BlockSpec((TM, D), lambda i: (i, 0)),          # x tile (unpadded feature dim)
            pl.BlockSpec((D, two_h), lambda i: (0, 0)),       # W1, VMEM-resident
            pl.BlockSpec((1, two_h), lambda i: (0, 0)),       # b1
            pl.BlockSpec((two_h, n_out), lambda i: (0, 0)),   # W2, VMEM-resident
            pl.BlockSpec((1, n_out), lambda i: (0, 0)),       # b2
        ],
        out_specs=pl.BlockSpec((TM, n_out), lambda i: (i, 0)),
        compiler_params=pltpu.CompilerParams(
            dimension_semantics=("parallel",)),
    )(x, w1, b1, w2, b2)

    mu = out[:, :A]
    value = out[:, A:A + 1]
    std = jnp.broadcast_to(packed["std_row"], mu.shape)
    return mu, std, value


# ----------------------------------------------------------------------------- init + reference
def init_params(key, num_inputs, num_outputs, hidden_size, std=0.0):
    """Mirrors init_weights: weights ~ N(0, 0.1), biases = 0.1, log_std = std."""
    k1, k2, k3, k4 = jax.random.split(key, 4)
    return {
        # critic: Linear(D,H) -> ReLU -> Linear(H,1)
        "w1c": 0.1 * jax.random.normal(k1, (num_inputs, hidden_size), jnp.float32),
        "b1c": jnp.full((1, hidden_size), 0.1, jnp.float32),
        "w2c": 0.1 * jax.random.normal(k2, (hidden_size, 1), jnp.float32),
        "b2c": jnp.full((1, 1), 0.1, jnp.float32),
        # actor: Linear(D,H) -> ReLU -> Linear(H,A)
        "w1a": 0.1 * jax.random.normal(k3, (num_inputs, hidden_size), jnp.float32),
        "b1a": jnp.full((1, hidden_size), 0.1, jnp.float32),
        "w2a": 0.1 * jax.random.normal(k4, (hidden_size, num_outputs), jnp.float32),
        "b2a": jnp.full((1, num_outputs), 0.1, jnp.float32),
        # log_std parameter (the Normal dist object is just (mu, std)).
        "log_std": jnp.full((1, num_outputs), std, jnp.float32),
    }


def reference_forward(x, p):
    hc = jnp.maximum(x @ p["w1c"] + p["b1c"], 0.0)
    val = hc @ p["w2c"] + p["b2c"]
    ha = jnp.maximum(x @ p["w1a"] + p["b1a"], 0.0)
    mu = ha @ p["w2a"] + p["b2a"]
    std = jnp.broadcast_to(jnp.exp(p["log_std"]), mu.shape)
    return mu, std, val


if __name__ == "__main__":
    # Small shapes consistent with a continuous-control env (e.g. Reacher):
    # observation dim 33, action dim 4, hidden 256, batch 8.
    batch, num_inputs, num_outputs, hidden = 8, 33, 4, 256

    key = jax.random.PRNGKey(0)
    k_params, k_x = jax.random.split(key)
    params = init_params(k_params, num_inputs, num_outputs, hidden, std=0.0)
    x = jax.random.normal(k_x, (batch, num_inputs), jnp.float32)
    mu_r, std_r, val_r = reference_forward(x, params)

    # ---- f32 compute path (tight tolerance) --------------------------------
    packed_f32 = prepare_params(params, compute_dtype=jnp.float32)
    mu, std, value = actor_critic_forward(x, packed_f32)
    jax.block_until_ready((mu, std, value))
    assert mu.shape == (batch, num_outputs)
    assert std.shape == (batch, num_outputs)
    assert value.shape == (batch, 1)
    assert jnp.allclose(mu, mu_r, atol=1e-5, rtol=1e-5)
    assert jnp.allclose(std, std_r, atol=1e-5, rtol=1e-5)
    assert jnp.allclose(value, val_r, atol=1e-5, rtol=1e-5)

    # ---- ragged batch (no padding path, masked last tile) ------------------
    x13 = jax.random.normal(jax.random.PRNGKey(1), (13, num_inputs), jnp.float32)
    mu13, std13, val13 = actor_critic_forward(x13, packed_f32)
    jax.block_until_ready((mu13, std13, val13))
    mu13_r, _, val13_r = reference_forward(x13, params)
    assert mu13.shape == (13, num_outputs) and val13.shape == (13, 1)
    assert jnp.allclose(mu13, mu13_r, atol=1e-5, rtol=1e-5)
    assert jnp.allclose(val13, val13_r, atol=1e-5, rtol=1e-5)

    # ---- bf16 MXU path (halves MXU passes / weight bytes; looser tolerance) -
    packed_bf16 = prepare_params(params, compute_dtype=jnp.bfloat16)
    mu_b, std_b, val_b = actor_critic_forward(x, packed_bf16)
    jax.block_until_ready((mu_b, std_b, val_b))
    assert jnp.allclose(mu_b, mu_r, atol=3e-2, rtol=3e-2)
    assert jnp.allclose(val_b, val_r, atol=3e-2, rtol=3e-2)
    assert jnp.allclose(std_b, std_r, atol=1e-5, rtol=1e-5)

    print("KERNEL_OK")
</pallas_src>

<mosaic_0001>
module attributes {stable_mosaic.version = 11 : i64} {
  func.func @actor_critic_kernel(%arg0: i32, %arg1: memref<8x33xf32, #tpu.memory_space<vmem>>, %arg2: memref<33x512xf32, #tpu.memory_space<vmem>>, %arg3: memref<1x512xf32, #tpu.memory_space<vmem>>, %arg4: memref<512x8xf32, #tpu.memory_space<vmem>>, %arg5: memref<1x8xf32, #tpu.memory_space<vmem>>, %arg6: memref<8x8xf32, #tpu.memory_space<vmem>>) attributes {dimension_semantics = [#tpu.dimension_semantics<parallel>], iteration_bounds = array<i64: 1>, scalar_prefetch = 0 : i64, scratch_operands = 0 : i64, tpu.core_type = #tpu.core_type<tc>, window_params = [{transform_indices = @transform_0, window_bounds = array<i64: 8, 33>}, {pipeline_mode = #tpu.pipeline_mode<synchronous>, transform_indices = @transform_1, window_bounds = array<i64: 33, 512>}, {pipeline_mode = #tpu.pipeline_mode<synchronous>, transform_indices = @transform_2, window_bounds = array<i64: 1, 512>}, {pipeline_mode = #tpu.pipeline_mode<synchronous>, transform_indices = @transform_3, window_bounds = array<i64: 512, 8>}, {pipeline_mode = #tpu.pipeline_mode<synchronous>, transform_indices = @transform_4, window_bounds = array<i64: 1, 8>}, {transform_indices = @transform_5, window_bounds = array<i64: 8, 8>}]} {
    %c0 = arith.constant 0 : index
    %c0_0 = arith.constant 0 : index
    %0 = vector.load %arg1[%c0, %c0_0] : memref<8x33xf32, #tpu.memory_space<vmem>>, vector<8x33xf32>
    %c0_1 = arith.constant 0 : index
    %c0_2 = arith.constant 0 : index
    %1 = vector.load %arg2[%c0_1, %c0_2] : memref<33x512xf32, #tpu.memory_space<vmem>>, vector<33x512xf32>
    %cst = arith.constant dense<0.000000e+00> : vector<8x512xf32>
    %2 = tpu.matmul %0, %1, %cst {dimension_numbers = #tpu.dot_dimension_numbers<[1], [0], [0], [1], [0, 0, 1, 1], [], []>} : vector<8x33xf32>, vector<33x512xf32>, vector<8x512xf32> -> vector<8x512xf32>
    %c0_3 = arith.constant 0 : index
    %c0_4 = arith.constant 0 : index
    %3 = vector.load %arg3[%c0_3, %c0_4] : memref<1x512xf32, #tpu.memory_space<vmem>>, vector<1x512xf32>
    %4 = vector.broadcast %3 : vector<1x512xf32> to vector<8x512xf32>
    %5 = arith.addf %2, %4 : vector<8x512xf32>
    %cst_5 = arith.constant 0.000000e+00 : f32
    %6 = vector.broadcast %cst_5 : f32 to vector<8x512xf32>
    %7 = arith.maximumf %5, %6 : vector<8x512xf32>
    %c0_6 = arith.constant 0 : index
    %c0_7 = arith.constant 0 : index
    %8 = vector.load %arg4[%c0_6, %c0_7] : memref<512x8xf32, #tpu.memory_space<vmem>>, vector<512x8xf32>
    %cst_8 = arith.constant dense<0.000000e+00> : vector<8x8xf32>
    %9 = tpu.matmul %7, %8, %cst_8 {dimension_numbers = #tpu.dot_dimension_numbers<[1], [0], [0], [1], [0, 0, 1, 1], [], []>} : vector<8x512xf32>, vector<512x8xf32>, vector<8x8xf32> -> vector<8x8xf32>
    %c0_9 = arith.constant 0 : index
    %c0_10 = arith.constant 0 : index
    %10 = vector.load %arg5[%c0_9, %c0_10] : memref<1x8xf32, #tpu.memory_space<vmem>>, vector<1x8xf32>
    %11 = vector.broadcast %10 : vector<1x8xf32> to vector<8x8xf32>
    %12 = arith.addf %9, %11 : vector<8x8xf32>
    %c0_11 = arith.constant 0 : index
    %c0_12 = arith.constant 0 : index
    %13 = vector.load %arg6[%c0_11, %c0_12] : memref<8x8xf32, #tpu.memory_space<vmem>>, vector<8x8xf32>
    tpu.vector_store %arg6[%c0_11, %c0_12], %12 {strides = array<i32>} : memref<8x8xf32, #tpu.memory_space<vmem>>, vector<8x8xf32>,
    return
  }
  func.func @transform_0(%arg0: i32) -> (i32, i32) {
    %c0_i32 = arith.constant 0 : i32
    %c0_i32_0 = arith.constant 0 : i32
    return %arg0, %c0_i32 : i32, i32
  }
  func.func @transform_1(%arg0: i32) -> (i32, i32) {
    %c0_i32 = arith.constant 0 : i32
    %c0_i32_0 = arith.constant 0 : i32
    %c0_i32_1 = arith.constant 0 : i32
    return %c0_i32, %c0_i32_0 : i32, i32
  }
  func.func @transform_2(%arg0: i32) -> (i32, i32) {
    %c0_i32 = arith.constant 0 : i32
    %c0_i32_0 = arith.constant 0 : i32
    %c0_i32_1 = arith.constant 0 : i32
    return %c0_i32, %c0_i32_0 : i32, i32
  }
  func.func @transform_3(%arg0: i32) -> (i32, i32) {
    %c0_i32 = arith.constant 0 : i32
    %c0_i32_0 = arith.constant 0 : i32
    %c0_i32_1 = arith.constant 0 : i32
    return %c0_i32, %c0_i32_0 : i32, i32
  }
  func.func @transform_4(%arg0: i32) -> (i32, i32) {
    %c0_i32 = arith.constant 0 : i32
    %c0_i32_0 = arith.constant 0 : i32
    %c0_i32_1 = arith.constant 0 : i32
    return %c0_i32, %c0_i32_0 : i32, i32
  }
  func.func @transform_5(%arg0: i32) -> (i32, i32) {
    %c0_i32 = arith.constant 0 : i32
    %c0_i32_0 = arith.constant 0 : i32
    return %arg0, %c0_i32 : i32, i32
  }
}

</mosaic_0001>

<llo_original>
// kernel: tpu_custom_call.1
$region0: #{tpu_custom_call.1}
  #allocation0 [shape = 'u32[]', space=smem, size = 0x4, offset = 0x4, fixed_abs, tag = 'smem constant byte address 0x4 - core index']
  #allocation1 [shape = 'u32[144,128]{1,0:T(1,128)}', space=vmem, size = 0x12000, scoped, tag = 'internal scratch']
  %s0 = inlined_call_operand.vmem [shape: f32[8,33], index: 0, kind: input, shape index: {}]
  %s1 = inlined_call_operand.vmem [shape: f32[33,512], index: 1, kind: input, shape index: {}]
  %s2 = inlined_call_operand.vmem [shape: f32[1,512], index: 2, kind: input, shape index: {}]
  %s3 = inlined_call_operand.vmem [shape: f32[512,8], index: 3, kind: input, shape index: {}]
  %s4 = inlined_call_operand.vmem [shape: f32[1,8], index: 4, kind: input, shape index: {}]
  %s5 = inlined_call_operand.hbm [shape: f32[8,8], index: 5, kind: output, shape index: {}]
  %s6 = sld [smem:[#allocation0]]
  $region30: #{tpu_custom_call.1} parent=0
    _
  %s8 = ssub.s32 1, %s6
  %s9 = scalar_select 0, %s8, %s6
  $region1: #{tpu_custom_call.1} parent=0
    #allocation2 [shape = 'u8[4096]{0}', space=vmem, size = 0x1000, scoped, tag = 'output window, operand 0, single buffered']
    #allocation3 [shape = 's32[1]{0}', space=sflag, size = 0x4, scoped, tag = 'scoped memory for tpu_custom_call.1']
    %10 = vsyncpa [#allocation3], 0
    // Predicated region
    $region2: #{tpu_custom_call.1} parent=1 // pred_check
      _
    $region3: #{tpu_custom_call.1} parent=1 // pred_check_branch
      %12 = sbr.rel (0) target = $region5
    $region4: #{tpu_custom_call.1} parent=1 // pred_region
      _
    $region5: #{tpu_custom_call.1} parent=1 // pred_fallthru
      _
    // Predicated region
    $region6: #{tpu_custom_call.1} parent=1 // pred_check
      _
    $region7: #{tpu_custom_call.1} parent=1 // pred_check_branch
      %14 = sbr.rel (0) target = $region9
    $region8: #{tpu_custom_call.1} parent=1 // pred_region
      _
    $region9: #{tpu_custom_call.1} parent=1 // pred_fallthru
      _
    // Predicated region
    $region10: #{tpu_custom_call.1} parent=1 // pred_check
      _
    $region11: #{tpu_custom_call.1} parent=1 // pred_check_branch
      %16 = sbr.rel (0) target = $region13
    $region12: #{tpu_custom_call.1} parent=1 // pred_region
      _
    $region13: #{tpu_custom_call.1} parent=1 // pred_fallthru
      _
    // Predicated region
    $region14: #{tpu_custom_call.1} parent=1 // pred_check
      _
    $region15: #{tpu_custom_call.1} parent=1 // pred_check_branch
      %18 = sbr.rel (0) target = $region17
    $region16: #{tpu_custom_call.1} parent=1 // pred_region
      _
    $region17: #{tpu_custom_call.1} parent=1 // pred_fallthru
      _
    // Predicated region
    $region18: #{tpu_custom_call.1} parent=1 // pred_check
      _
    $region19: #{tpu_custom_call.1} parent=1 // pred_check_branch
      %20 = sbr.rel (0) target = $region21
    $region20: #{tpu_custom_call.1} parent=1 // pred_region
      _
    $region21: #{tpu_custom_call.1} parent=1 // pred_fallthru
      _
    %v21 = vld [vmem:[%s0] sm:$0xff]
    %v22 = vld [vmem:[%s1] sm:$0xff]
    %v23 = vld [vmem:[%s1 + $0x8] sm:$0xff]
    %v24 = vld [vmem:[%s1 + $0x10] sm:$0xff]
    %v25 = vld [vmem:[%s1 + $0x18] sm:$0xff]
    %v26 = vld [vmem:[%s1 + $0x20] sm:$0xff]
    %v27 = vld [vmem:[%s1 + $0x28] sm:$0xff]
    %v28 = vld [vmem:[%s1 + $0x30] sm:$0xff]
    %v29 = vld [vmem:[%s1 + $0x38] sm:$0xff]
    %v30 = vld [vmem:[%s1 + $0x40] sm:$0xff]
    %v31 = vld [vmem:[%s1 + $0x48] sm:$0xff]
    %v32 = vld [vmem:[%s1 + $0x50] sm:$0xff]
    %v33 = vld [vmem:[%s1 + $0x58] sm:$0xff]
    %v34 = vld [vmem:[%s1 + $0x60] sm:$0xff]
    %v35 = vld [vmem:[%s1 + $0x68] sm:$0xff]
    %v36 = vld [vmem:[%s1 + $0x70] sm:$0xff]
    %v37 = vld [vmem:[%s1 + $0x78] sm:$0xff]
    %v38 = vld [vmem:[%s1 + $0x80] sm:$0x1]
    %v39 = vld [vmem:[%s1 + $0x88] sm:$0x1]
    %v40 = vld [vmem:[%s1 + $0x90] sm:$0x1]
    %v41 = vld [vmem:[%s1 + $0x98] sm:$0x1]
    %v42 = vld [vmem:[%s2] sm:$0xf]
    %v44 = vlaneseq
    %v45 = vshrl.u32 %v44, 7
    %v46 = vsub.s32 0, %v45
    %v47 = vrot.slane %v42, %v46
    %v48 = vlaneseq
    %v49 = vshrl.u32 %v48, 7
    %v50 = vsub.s32 1, %v49
    %v51 = vrot.slane %v42, %v50
    %v52 = vlaneseq
    %v53 = vshrl.u32 %v52, 7
    %v54 = vsub.s32 2, %v53
    %v55 = vrot.slane %v42, %v54
    %v56 = vlaneseq
    %v57 = vshrl.u32 %v56, 7
    %v58 = vsub.s32 3, %v57
    %v59 = vrot.slane %v42, %v58
    %vm64 = vcmask 269312
    %v66 = vsel %vm64, %v21, 0
    %vm68 = vcmask 1040384
    %v70 = vsel %vm68, %v38, 0
    %v73 = vsel %vm68, %v39, 0
    %v76 = vsel %vm68, %v40, 0
    %v79 = vsel %vm68, %v41, 0
    %81 = vmatprep.subr.mxu0 0.0
    %82 = vmatpush1.msra.mxu0 0.0
    %83 = vmatprep.subr.mxu0 0.0
    %84 = vmatpush1.msra.mxu0 0.0
    %85 = vmatprep.subr.mxu0 0.0
    %86 = vmatpush1.msra.mxu0 0.0
    %87 = vmatprep.subr.mxu0 0.0
    %88 = vmatpush1.msra.mxu0 0.0
    %89 = vmatprep.subr.mxu0 0.0
    %90 = vmatpush1.msra.mxu0 0.0
    %91 = vmatprep.subr.mxu0 0.0
    %92 = vmatpush1.msra.mxu0 0.0
    %93 = vmatprep.subr.mxu0 0.0
    %94 = vmatpush1.msra.mxu0 0.0
    %95 = vmatprep.subr.mxu0 0.0
    %96 = vmatpush1.msra.mxu0 0.0
    %97 = vmatprep.subr.mxu0 0.0
    %98 = vmatpush1.msra.mxu0 0.0
    %99 = vmatprep.subr.mxu0 0.0
    %100 = vmatpush1.msra.mxu0 0.0
    %101 = vmatprep.subr.mxu0 0.0
    %102 = vmatpush1.msra.mxu0 0.0
    %103 = vmatprep.subr.mxu0 %v73
    %104 = vmatpush1.msra.mxu0 %v70
    %105 = vmatprep.subr.mxu0 %v35
    %106 = vmatpush1.msra.mxu0 %v34
    %107 = vmatprep.subr.mxu0 %v31
    %108 = vmatpush1.msra.mxu0 %v30
    %109 = vmatprep.subr.mxu0 %v27
    %110 = vmatpush1.msra.mxu0 %v26
    %111 = vmatprep.subr.mxu0 %v23
    %112 = vmatpush1.msra.mxu0 %v22
    %113 = vmatprep.subr.mxu0 0.0
    %114 = vmatpush2.msra.mxu0 0.0
    %115 = vmatprep.subr.mxu0 0.0
    %116 = vmatpush2.msra.mxu0 0.0
    %117 = vmatprep.subr.mxu0 0.0
    %118 = vmatpush2.msra.mxu0 0.0
    %119 = vmatprep.subr.mxu0 0.0
    %120 = vmatpush2.msra.mxu0 0.0
    %121 = vmatprep.subr.mxu0 0.0
    %122 = vmatpush2.msra.mxu0 0.0
    %123 = vmatprep.subr.mxu0 0.0
    %124 = vmatpush2.msra.mxu0 0.0
    %125 = vmatprep.subr.mxu0 0.0
    %126 = vmatpush2.msra.mxu0 0.0
    %127 = vmatprep.subr.mxu0 0.0
    %128 = vmatpush2.msra.mxu0 0.0
    %129 = vmatprep.subr.mxu0 0.0
    %130 = vmatpush2.msra.mxu0 0.0
    %131 = vmatprep.subr.mxu0 0.0
    %132 = vmatpush2.msra.mxu0 0.0
    %133 = vmatprep.subr.mxu0 0.0
    %134 = vmatpush2.msra.mxu0 0.0
    %135 = vmatprep.subr.mxu0 0.0
    %136 = vmatpush2.msra.mxu0 0.0
    %137 = vmatprep.subr.mxu0 0.0
    %138 = vmatpush2.msra.mxu0 0.0
    %139 = vmatprep.subr.mxu0 0.0
    %140 = vmatpush2.msra.mxu0 0.0
    %141 = vmatprep.subr.mxu0 0.0
    %142 = vmatpush2.msra.mxu0 0.0
    %143 = vmatprep.subr.mxu0 0.0
    %144 = vmatpush2.msra.mxu0 0.0
    %145 = vmatprep.mubr.f32.mxu0 0.0
    %146 = vmatmul.mubr.f32.gmra.mxu0 %v66
    %v147 = vpop.f32.mrf.mxu0
    %v148 = vadd.f32 %v47, %v147
    %v149 = vpop.f32.mrf.mxu0
    %v150 = vadd.f32 %v51, %v149
    %151 = vdwg.mxu0
    %152 = vmatprep.subr.mxu0 0.0
    %153 = vmatpush1.msra.mxu0 0.0
    %154 = vmatprep.subr.mxu0 0.0
    %155 = vmatpush1.msra.mxu0 0.0
    %156 = vmatprep.subr.mxu0 0.0
    %157 = vmatpush1.msra.mxu0 0.0
    %158 = vmatprep.subr.mxu0 0.0
    %159 = vmatpush1.msra.mxu0 0.0
    %160 = vmatprep.subr.mxu0 0.0
    %161 = vmatpush1.msra.mxu0 0.0
    %162 = vmatprep.subr.mxu0 0.0
    %163 = vmatpush1.msra.mxu0 0.0
    %164 = vmatprep.subr.mxu0 0.0
    %165 = vmatpush1.msra.mxu0 0.0
    %166 = vmatprep.subr.mxu0 0.0
    %167 = vmatpush1.msra.mxu0 0.0
    %168 = vmatprep.subr.mxu0 0.0
    %169 = vmatpush1.msra.mxu0 0.0
    %170 = vmatprep.subr.mxu0 0.0
    %171 = vmatpush1.msra.mxu0 0.0
    %172 = vmatprep.subr.mxu0 0.0
    %173 = vmatpush1.msra.mxu0 0.0
    %174 = vmatprep.subr.mxu0 %v79
    %175 = vmatpush1.msra.mxu0 %v76
    %176 = vmatprep.subr.mxu0 %v37
    %177 = vmatpush1.msra.mxu0 %v36
    %178 = vmatprep.subr.mxu0 %v33
    %179 = vmatpush1.msra.mxu0 %v32
    %180 = vmatprep.subr.mxu0 %v29
    %181 = vmatpush1.msra.mxu0 %v28
    %182 = vmatprep.subr.mxu0 %v25
    %183 = vmatpush1.msra.mxu0 %v24
    %184 = vmatprep.subr.mxu0 0.0
    %185 = vmatpush2.msra.mxu0 0.0
    %186 = vmatprep.subr.mxu0 0.0
    %187 = vmatpush2.msra.mxu0 0.0
    %188 = vmatprep.subr.mxu0 0.0
    %189 = vmatpush2.msra.mxu0 0.0
    %190 = vmatprep.subr.mxu0 0.0
    %191 = vmatpush2.msra.mxu0 0.0
    %192 = vmatprep.subr.mxu0 0.0
    %193 = vmatpush2.msra.mxu0 0.0
    %194 = vmatprep.subr.mxu0 0.0
    %195 = vmatpush2.msra.mxu0 0.0
    %196 = vmatprep.subr.mxu0 0.0
    %197 = vmatpush2.msra.mxu0 0.0
    %198 = vmatprep.subr.mxu0 0.0
    %199 = vmatpush2.msra.mxu0 0.0
    %200 = vmatprep.subr.mxu0 0.0
    %201 = vmatpush2.msra.mxu0 0.0
    %202 = vmatprep.subr.mxu0 0.0
    %203 = vmatpush2.msra.mxu0 0.0
    %204 = vmatprep.subr.mxu0 0.0
    %205 = vmatpush2.msra.mxu0 0.0
    %206 = vmatprep.subr.mxu0 0.0
    %207 = vmatpush2.msra.mxu0 0.0
    %208 = vmatprep.subr.mxu0 0.0
    %209 = vmatpush2.msra.mxu0 0.0
    %210 = vmatprep.subr.mxu0 0.0
    %211 = vmatpush2.msra.mxu0 0.0
    %212 = vmatprep.subr.mxu0 0.0
    %213 = vmatpush2.msra.mxu0 0.0
    %214 = vmatprep.subr.mxu0 0.0
    %215 = vmatpush2.msra.mxu0 0.0
    %216 = vmatprep.mubr.f32.mxu0 0.0
    %217 = vmatmul.mubr.f32.gmra.mxu0 %v66
    %v218 = vpop.f32.mrf.mxu0
    %v219 = vadd.f32 %v55, %v218
    %v220 = vpop.f32.mrf.mxu0
    %v221 = vadd.f32 %v59, %v220
    %222 = vdwg.mxu0
    %v223 = vmax.f32 %v148, 0.0
    %v224 = vmax.f32 %v150, 0.0
    %v225 = vmax.f32 %v219, 0.0
    %v226 = vmax.f32 %v221, 0.0
    %v227 = vld [vmem:[%s3] sm:$0xff]
    %v228 = vld [vmem:[%s3 + $0x8] sm:$0xff]
    %v229 = vld [vmem:[%s3 + $0x10] sm:$0xff]
    %v230 = vld [vmem:[%s3 + $0x18] sm:$0xff]
    %v231 = vld [vmem:[%s3 + $0x20] sm:$0xff]
    %v232 = vld [vmem:[%s3 + $0x28] sm:$0xff]
    %v233 = vld [vmem:[%s3 + $0x30] sm:$0xff]
    %v234 = vld [vmem:[%s3 + $0x38] sm:$0xff]
    %v235 = vld [vmem:[%s3 + $0x40] sm:$0xff]
    %v236 = vld [vmem:[%s3 + $0x48] sm:$0xff]
    %v237 = vld [vmem:[%s3 + $0x50] sm:$0xff]
    %v238 = vld [vmem:[%s3 + $0x58] sm:$0xff]
    %v239 = vld [vmem:[%s3 + $0x60] sm:$0xff]
    %v240 = vld [vmem:[%s3 + $0x68] sm:$0xff]
    %v241 = vld [vmem:[%s3 + $0x70] sm:$0xff]
    %v242 = vld [vmem:[%s3 + $0x78] sm:$0xff]
    %v243 = vld [vmem:[%s3 + $0x80] sm:$0xff]
    %v244 = vld [vmem:[%s3 + $0x88] sm:$0xff]
    %v245 = vld [vmem:[%s3 + $0x90] sm:$0xff]
    %v246 = vld [vmem:[%s3 + $0x98] sm:$0xff]
    %v247 = vld [vmem:[%s3 + $0xa0] sm:$0xff]
    %v248 = vld [vmem:[%s3 + $0xa8] sm:$0xff]
    %v249 = vld [vmem:[%s3 + $0xb0] sm:$0xff]
    %v250 = vld [vmem:[%s3 + $0xb8] sm:$0xff]
    %v251 = vld [vmem:[%s3 + $0xc0] sm:$0xff]
    %v252 = vld [vmem:[%s3 + $0xc8] sm:$0xff]
    %v253 = vld [vmem:[%s3 + $0xd0] sm:$0xff]
    %v254 = vld [vmem:[%s3 + $0xd8] sm:$0xff]
    %v255 = vld [vmem:[%s3 + $0xe0] sm:$0xff]
    %v256 = vld [vmem:[%s3 + $0xe8] sm:$0xff]
    %v257 = vld [vmem:[%s3 + $0xf0] sm:$0xff]
    %v258 = vld [vmem:[%s3 + $0xf8] sm:$0xff]
    %v259 = vld [vmem:[%s3 + $0x100] sm:$0xff]
    %v260 = vld [vmem:[%s3 + $0x108] sm:$0xff]
    %v261 = vld [vmem:[%s3 + $0x110] sm:$0xff]
    %v262 = vld [vmem:[%s3 + $0x118] sm:$0xff]
    %v263 = vld [vmem:[%s3 + $0x120] sm:$0xff]
    %v264 = vld [vmem:[%s3 + $0x128] sm:$0xff]
    %v265 = vld [vmem:[%s3 + $0x130] sm:$0xff]
    %v266 = vld [vmem:[%s3 + $0x138] sm:$0xff]
    %v267 = vld [vmem:[%s3 + $0x140] sm:$0xff]
    %v268 = vld [vmem:[%s3 + $0x148] sm:$0xff]
    %v269 = vld [vmem:[%s3 + $0x150] sm:$0xff]
    %v270 = vld [vmem:[%s3 + $0x158] sm:$0xff]
    %v271 = vld [vmem:[%s3 + $0x160] sm:$0xff]
    %v272 = vld [vmem:[%s3 + $0x168] sm:$0xff]
    %v273 = vld [vmem:[%s3 + $0x170] sm:$0xff]
    %v274 = vld [vmem:[%s3 + $0x178] sm:$0xff]
    %v275 = vld [vmem:[%s3 + $0x180] sm:$0xff]
    %v276 = vld [vmem:[%s3 + $0x188] sm:$0xff]
    %v277 = vld [vmem:[%s3 + $0x190] sm:$0xff]
    %v278 = vld [vmem:[%s3 + $0x198] sm:$0xff]
    %v279 = vld [vmem:[%s3 + $0x1a0] sm:$0xff]
    %v280 = vld [vmem:[%s3 + $0x1a8] sm:$0xff]
    %v281 = vld [vmem:[%s3 + $0x1b0] sm:$0xff]
    %v282 = vld [vmem:[%s3 + $0x1b8] sm:$0xff]
    %v283 = vld [vmem:[%s3 + $0x1c0] sm:$0xff]
    %v284 = vld [vmem:[%s3 + $0x1c8] sm:$0xff]
    %v285 = vld [vmem:[%s3 + $0x1d0] sm:$0xff]
    %v286 = vld [vmem:[%s3 + $0x1d8] sm:$0xff]
    %v287 = vld [vmem:[%s3 + $0x1e0] sm:$0xff]
    %v288 = vld [vmem:[%s3 + $0x1e8] sm:$0xff]
    %v289 = vld [vmem:[%s3 + $0x1f0] sm:$0xff]
    %v290 = vld [vmem:[%s3 + $0x1f8] sm:$0xff]
    %v291 = vld [vmem:[%s4] sm:$0x1]
    %v293 = vlaneseq
    %v294 = vshrl.u32 %v293, 7
    %v295 = vsub.s32 0, %v294
    %v296 = vrot.slane %v291, %v295
    %298 = vmatprep.subr.mxu0 0.0
    %299 = vmatpush1.msra.mxu0 %v242
    %300 = vmatprep.subr.mxu0 0.0
    %301 = vmatpush1.msra.mxu0 %v241
    %302 = vmatprep.subr.mxu0 0.0
    %303 = vmatpush1.msra.mxu0 %v240
    %304 = vmatprep.subr.mxu0 0.0
    %305 = vmatpush1.msra.mxu0 %v239
    %306 = vmatprep.subr.mxu0 0.0
    %307 = vmatpush1.msra.mxu0 %v238
    %308 = vmatprep.subr.mxu0 0.0
    %309 = vmatpush1.msra.mxu0 %v237
    %310 = vmatprep.subr.mxu0 0.0
    %311 = vmatpush1.msra.mxu0 %v236
    %312 = vmatprep.subr.mxu0 0.0
    %313 = vmatpush1.msra.mxu0 %v235
    %314 = vmatprep.subr.mxu0 0.0
    %315 = vmatpush1.msra.mxu0 %v234
    %316 = vmatprep.subr.mxu0 0.0
    %317 = vmatpush1.msra.mxu0 %v233
    %318 = vmatprep.subr.mxu0 0.0
    %319 = vmatpush1.msra.mxu0 %v232
    %320 = vmatprep.subr.mxu0 0.0
    %321 = vmatpush1.msra.mxu0 %v231
    %322 = vmatprep.subr.mxu0 0.0
    %323 = vmatpush1.msra.mxu0 %v230
    %324 = vmatprep.subr.mxu0 0.0
    %325 = vmatpush1.msra.mxu0 %v229
    %326 = vmatprep.subr.mxu0 0.0
    %327 = vmatpush1.msra.mxu0 %v228
    %328 = vmatprep.subr.mxu0 0.0
    %329 = vmatpush1.msra.mxu0 %v227
    %330 = vmatprep.subr.mxu0 0.0
    %331 = vmatpush2.msra.mxu0 %v258
    %332 = vmatprep.subr.mxu0 0.0
    %333 = vmatpush2.msra.mxu0 %v257
    %334 = vmatprep.subr.mxu0 0.0
    %335 = vmatpush2.msra.mxu0 %v256
    %336 = vmatprep.subr.mxu0 0.0
    %337 = vmatpush2.msra.mxu0 %v255
    %338 = vmatprep.subr.mxu0 0.0
    %339 = vmatpush2.msra.mxu0 %v254
    %340 = vmatprep.subr.mxu0 0.0
    %341 = vmatpush2.msra.mxu0 %v253
    %342 = vmatprep.subr.mxu0 0.0
    %343 = vmatpush2.msra.mxu0 %v252
    %344 = vmatprep.subr.mxu0 0.0
    %345 = vmatpush2.msra.mxu0 %v251
    %346 = vmatprep.subr.mxu0 0.0
    %347 = vmatpush2.msra.mxu0 %v250
    %348 = vmatprep.subr.mxu0 0.0
    %349 = vmatpush2.msra.mxu0 %v249
    %350 = vmatprep.subr.mxu0 0.0
    %351 = vmatpush2.msra.mxu0 %v248
    %352 = vmatprep.subr.mxu0 0.0
    %353 = vmatpush2.msra.mxu0 %v247
    %354 = vmatprep.subr.mxu0 0.0
    %355 = vmatpush2.msra.mxu0 %v246
    %356 = vmatprep.subr.mxu0 0.0
    %357 = vmatpush2.msra.mxu0 %v245
    %358 = vmatprep.subr.mxu0 0.0
    %359 = vmatpush2.msra.mxu0 %v244
    %360 = vmatprep.subr.mxu0 0.0
    %361 = vmatpush2.msra.mxu0 %v243
    %362 = vmatprep.mubr.f32.mxu0 %v224
    %363 = vmatmul.mubr.f32.gmra.mxu0 %v223
    %v364 = vpop.f32.mrf.mxu0
    %v365 = vadd.f32 %v296, %v364
    %v366 = vpop.f32.mrf.mxu0
    %367 = vdwg.mxu0
    %368 = vmatprep.subr.mxu0 0.0
    %369 = vmatpush1.msra.mxu0 %v274
    %370 = vmatprep.subr.mxu0 0.0
    %371 = vmatpush1.msra.mxu0 %v273
    %372 = vmatprep.subr.mxu0 0.0
    %373 = vmatpush1.msra.mxu0 %v272
    %374 = vmatprep.subr.mxu0 0.0
    %375 = vmatpush1.msra.mxu0 %v271
    %376 = vmatprep.subr.mxu0 0.0
    %377 = vmatpush1.msra.mxu0 %v270
    %378 = vmatprep.subr.mxu0 0.0
    %379 = vmatpush1.msra.mxu0 %v269
    %380 = vmatprep.subr.mxu0 0.0
    %381 = vmatpush1.msra.mxu0 %v268
    %382 = vmatprep.subr.mxu0 0.0
    %383 = vmatpush1.msra.mxu0 %v267
    %384 = vmatprep.subr.mxu0 0.0
    %385 = vmatpush1.msra.mxu0 %v266
    %386 = vmatprep.subr.mxu0 0.0
    %387 = vmatpush1.msra.mxu0 %v265
    %388 = vmatprep.subr.mxu0 0.0
    %389 = vmatpush1.msra.mxu0 %v264
    %390 = vmatprep.subr.mxu0 0.0
    %391 = vmatpush1.msra.mxu0 %v263
    %392 = vmatprep.subr.mxu0 0.0
    %393 = vmatpush1.msra.mxu0 %v262
    %394 = vmatprep.subr.mxu0 0.0
    %395 = vmatpush1.msra.mxu0 %v261
    %396 = vmatprep.subr.mxu0 0.0
    %397 = vmatpush1.msra.mxu0 %v260
    %398 = vmatprep.subr.mxu0 0.0
    %399 = vmatpush1.msra.mxu0 %v259
    %400 = vmatprep.subr.mxu0 0.0
    %401 = vmatpush2.msra.mxu0 %v290
    %402 = vmatprep.subr.mxu0 0.0
    %403 = vmatpush2.msra.mxu0 %v289
    %404 = vmatprep.subr.mxu0 0.0
    %405 = vmatpush2.msra.mxu0 %v288
    %406 = vmatprep.subr.mxu0 0.0
    %407 = vmatpush2.msra.mxu0 %v287
    %408 = vmatprep.subr.mxu0 0.0
    %409 = vmatpush2.msra.mxu0 %v286
    %410 = vmatprep.subr.mxu0 0.0
    %411 = vmatpush2.msra.mxu0 %v285
    %412 = vmatprep.subr.mxu0 0.0
    %413 = vmatpush2.msra.mxu0 %v284
    %414 = vmatprep.subr.mxu0 0.0
    %415 = vmatpush2.msra.mxu0 %v283
    %416 = vmatprep.subr.mxu0 0.0
    %417 = vmatpush2.msra.mxu0 %v282
    %418 = vmatprep.subr.mxu0 0.0
    %419 = vmatpush2.msra.mxu0 %v281
    %420 = vmatprep.subr.mxu0 0.0
    %421 = vmatpush2.msra.mxu0 %v280
    %422 = vmatprep.subr.mxu0 0.0
    %423 = vmatpush2.msra.mxu0 %v279
    %424 = vmatprep.subr.mxu0 0.0
    %425 = vmatpush2.msra.mxu0 %v278
    %426 = vmatprep.subr.mxu0 0.0
    %427 = vmatpush2.msra.mxu0 %v277
    %428 = vmatprep.subr.mxu0 0.0
    %429 = vmatpush2.msra.mxu0 %v276
    %430 = vmatprep.subr.mxu0 0.0
    %431 = vmatpush2.msra.mxu0 %v275
    %432 = vmatprep.mubr.f32.mxu0 %v226
    %433 = vmatmul.mubr.f32.gmra.mxu0 %v225
    %v434 = vpop.f32.mrf.mxu0
    %v435 = vadd.f32 %v365, %v434
    %v436 = vpop.f32.mrf.mxu0
    %437 = vdwg.mxu0
    %vm438 = vcmask 64512
    %439 = vst.msk [vmem:[#allocation2] sm:$0xff] %vm438, %v435
    // Predicated region
    $region22: #{tpu_custom_call.1} parent=1 // pred_check
      _
    $region23: #{tpu_custom_call.1} parent=1 // pred_check_branch
      %441 = sbr.rel (0) target = $region25
    $region24: #{tpu_custom_call.1} parent=1 // pred_region
      %s443 = ssub.s32 128, 128
      %444 = vsyncadd [#allocation3], %s443
      %s446 = sshll.u32 [#allocation2], 4
      %s447 = int_to_ptr.vmem [resolvable:$true] %s446
      %449 = dma.vmem_to_hbm [thread:$0]  %s447, 128, %s5, [#allocation3]
    $region25: #{tpu_custom_call.1} parent=1 // pred_fallthru
      _
    // Predicated region
    $region26: #{tpu_custom_call.1} parent=1 // pred_check
      _
    $region27: #{tpu_custom_call.1} parent=1 // pred_check_branch
      %451 = sbr.rel (0) target = $region29
    $region28: #{tpu_custom_call.1} parent=1 // pred_region
      %452 = dma.done [#allocation3], 128
    $region29: #{tpu_custom_call.1} parent=1 // pred_fallthru
      _
    %453 = vsyncpa [#allocation3], 1

</llo_original>
